<compile_context>
chip_gen: v7x
topology: tpu7x:2x2x1
jax: 0.10.0
libtpu: 0.0.40
codegen_flags: <defaults>
</compile_context>

<pallas_src>
import functools
import math

import jax
import jax.numpy as jnp
from jax.experimental import pallas as pl
from jax.experimental.pallas import tpu as pltpu


def _edgewise_sum_kernel(dst_ref, feat_ref, out_ref, *scratch,
                         tile_n, factor, use_scratch):
    n_idx = pl.program_id(0)
    e_idx = pl.program_id(1)
    acc_ref = scratch[0] if use_scratch else out_ref

    @pl.when(e_idx == 0)
    def _():
        acc_ref[...] = jnp.zeros_like(acc_ref)

    dst = dst_ref[...]                                      # (1, tile_e) int32
    tile_e = dst.shape[1]
    # Global node ids covered by this node tile, in (tile_n, tile_e) orientation.
    node_ids = (jax.lax.broadcasted_iota(jnp.int32, (tile_n, tile_e), 0)
                + n_idx * tile_n)
    onehot = (dst == node_ids).astype(feat_ref.dtype)       # (tile_n, tile_e)
    # Scatter-add on the MXU: (tile_n, tile_e) @ (tile_e, D) -> (tile_n, D), f32 acc.
    acc_ref[...] += jnp.dot(onehot, feat_ref[...],
                            preferred_element_type=jnp.float32)

    if use_scratch or factor != 1.0:
        @pl.when(e_idx == pl.num_programs(1) - 1)
        def _():
            if use_scratch:
                out_ref[...] = (acc_ref[...] * factor).astype(out_ref.dtype)
            else:
                out_ref[...] = out_ref[...] * factor


def edgewise_reduce(edge_feat, edge_dst, num_nodes, avg_num_neighbors=None,
                    normalize_edge_reduce=True, tile_n=128, tile_e=256):
    """Sum per-edge features into per-node features (EdgewiseReduce, reduce='sum')."""
    E, D = edge_feat.shape
    factor = 1.0
    if normalize_edge_reduce and avg_num_neighbors is not None:
        factor = 1.0 / math.sqrt(avg_num_neighbors)

    # Lane-dense feature dim: pad D to a multiple of 128.
    D_pad = pl.cdiv(D, 128) * 128
    # Edge tile (MXU contraction depth, lane axis of the dst row): multiple of 128.
    tile_e = max(128, min(tile_e, pl.cdiv(E, 128) * 128))
    E_pad = pl.cdiv(E, tile_e) * tile_e
    # Node tile (sublane axis of the output block): multiple of 8.
    tile_n = max(8, min(tile_n, pl.cdiv(num_nodes, 8) * 8))
    N_pad = pl.cdiv(num_nodes, tile_n) * tile_n

    feat = edge_feat
    if E_pad != E or D_pad != D:
        feat = jnp.pad(feat, ((0, E_pad - E), (0, D_pad - D)))
    dst = edge_dst.astype(jnp.int32)
    if E_pad != E:
        # Padded edges get dst = -1: never matches any node id -> contributes 0.
        dst = jnp.pad(dst, (0, E_pad - E), constant_values=-1)
    dst_row = dst.reshape(1, E_pad)

    out_dtype = edge_feat.dtype
    use_scratch = (out_dtype != jnp.float32)
    scratch_shapes = ([pltpu.VMEM((tile_n, D_pad), jnp.float32)]
                      if use_scratch else [])

    kernel = functools.partial(_edgewise_sum_kernel, tile_n=tile_n,
                               factor=factor, use_scratch=use_scratch)

    out = pl.pallas_call(
        kernel,
        out_shape=jax.ShapeDtypeStruct((N_pad, D_pad), out_dtype),
        grid_spec=pltpu.PrefetchScalarGridSpec(
            num_scalar_prefetch=0,
            grid=(N_pad // tile_n, E_pad // tile_e),
            in_specs=[
                pl.BlockSpec((1, tile_e), lambda n, e: (0, e)),
                pl.BlockSpec((tile_e, D_pad), lambda n, e: (e, 0)),
            ],
            out_specs=pl.BlockSpec((tile_n, D_pad), lambda n, e: (n, 0)),
            scratch_shapes=scratch_shapes,
        ),
        compiler_params=pltpu.CompilerParams(
            # Node tiles are independent -> "parallel" (megacore). The edge axis
            # carries the resident accumulator and MUST stay "arbitrary".
            dimension_semantics=("parallel", "arbitrary"),
            vmem_limit_bytes=32 * 1024 * 1024,
        ),
    )(dst_row, feat)
    return out[:num_nodes, :D]


if __name__ == "__main__":
    key = jax.random.PRNGKey(0)
    k1, k2 = jax.random.split(key)

    num_nodes = 16        # len(data[POSITIONS_KEY])
    num_edges = 64        # number of edges
    feat_dim = 32         # irreps dim of the edge field
    avg_num_neighbors = 4.0
    factor = 1.0 / math.sqrt(avg_num_neighbors)

    edge_feat = jax.random.normal(k1, (num_edges, feat_dim), dtype=jnp.float32)
    edge_dst = jax.random.randint(k2, (num_edges,), 0, num_nodes, dtype=jnp.int32)

    # f32 path: accumulates directly into the VMEM-resident output block.
    out = edgewise_reduce(edge_feat, edge_dst, num_nodes,
                          avg_num_neighbors=avg_num_neighbors,
                          normalize_edge_reduce=True)
    out = jax.block_until_ready(out)
    ref = jax.ops.segment_sum(edge_feat, edge_dst, num_segments=num_nodes) * factor
    assert out.shape == (num_nodes, feat_dim)
    assert jnp.allclose(out, ref, atol=1e-5, rtol=1e-5)

    # bf16 path: native bf16 MXU operands + f32 scratch accumulator.
    feat_bf16 = edge_feat.astype(jnp.bfloat16)
    out_bf16 = edgewise_reduce(feat_bf16, edge_dst, num_nodes,
                               avg_num_neighbors=avg_num_neighbors,
                               normalize_edge_reduce=True)
    out_bf16 = jax.block_until_ready(out_bf16)
    ref_bf16 = jax.ops.segment_sum(feat_bf16.astype(jnp.float32), edge_dst,
                                   num_segments=num_nodes) * factor
    assert out_bf16.dtype == jnp.bfloat16
    assert jnp.allclose(out_bf16.astype(jnp.float32), ref_bf16, atol=3e-2, rtol=3e-2)

    print("KERNEL_OK")
</pallas_src>

<mosaic_0001>
module attributes {stable_mosaic.version = 11 : i64} {
  func.func @_edgewise_sum_kernel(%arg0: i32, %arg1: i32, %arg2: memref<1x128xi32, #tpu.memory_space<vmem>>, %arg3: memref<128x128xf32, #tpu.memory_space<vmem>>, %arg4: memref<16x128xf32, #tpu.memory_space<vmem>>) attributes {dimension_semantics = [#tpu.dimension_semantics<parallel>, #tpu.dimension_semantics<arbitrary>], iteration_bounds = array<i64: 1, 1>, scalar_prefetch = 0 : i64, scratch_operands = 0 : i64, tpu.core_type = #tpu.core_type<tc>, window_params = [{transform_indices = @transform_0, window_bounds = array<i64: 1, 128>}, {transform_indices = @transform_1, window_bounds = array<i64: 128, 128>}, {transform_indices = @transform_2, window_bounds = array<i64: 16, 128>}]} {
    %c0_i32 = arith.constant 0 : i32
    %0 = arith.cmpi eq, %arg1, %c0_i32 : i32
    %1 = arith.extui %0 : i1 to i32
    %c0_i32_0 = arith.constant 0 : i32
    %2 = arith.cmpi ne, %1, %c0_i32_0 : i32
    scf.if %2 {
      %cst_10 = arith.constant 0.000000e+00 : f32
      %20 = vector.broadcast %cst_10 : f32 to vector<16x128xf32>
      %c0_11 = arith.constant 0 : index
      %c0_12 = arith.constant 0 : index
      %21 = vector.load %arg4[%c0_11, %c0_12] : memref<16x128xf32, #tpu.memory_space<vmem>>, vector<16x128xf32>
      tpu.vector_store %arg4[%c0_11, %c0_12], %20 {strides = array<i32>} : memref<16x128xf32, #tpu.memory_space<vmem>>, vector<16x128xf32>,
    } else {
    }
    %c0 = arith.constant 0 : index
    %c0_1 = arith.constant 0 : index
    %3 = vector.load %arg2[%c0, %c0_1] : memref<1x128xi32, #tpu.memory_space<vmem>>, vector<1x128xi32>
    %4 = tpu.iota {dimensions = array<i32: 0>} : vector<16x128xi32>
    %c16_i32 = arith.constant 16 : i32
    %5 = arith.muli %arg0, %c16_i32 : i32
    %6 = vector.broadcast %5 : i32 to vector<16x128xi32>
    %7 = arith.addi %4, %6 : vector<16x128xi32>
    %8 = vector.broadcast %3 : vector<1x128xi32> to vector<16x128xi32>
    %9 = arith.cmpi eq, %8, %7 : vector<16x128xi32>
    %10 = arith.extui %9 : vector<16x128xi1> to vector<16x128xi32>
    %11 = arith.sitofp %10 : vector<16x128xi32> to vector<16x128xf32>
    %c0_2 = arith.constant 0 : index
    %c0_3 = arith.constant 0 : index
    %12 = vector.load %arg4[%c0_2, %c0_3] : memref<16x128xf32, #tpu.memory_space<vmem>>, vector<16x128xf32>
    %c0_4 = arith.constant 0 : index
    %c0_5 = arith.constant 0 : index
    %13 = vector.load %arg3[%c0_4, %c0_5] : memref<128x128xf32, #tpu.memory_space<vmem>>, vector<128x128xf32>
    %cst = arith.constant dense<0.000000e+00> : vector<16x128xf32>
    %14 = tpu.matmul %11, %13, %cst {dimension_numbers = #tpu.dot_dimension_numbers<[1], [0], [0], [1], [0, 0, 1, 1], [], []>} : vector<16x128xf32>, vector<128x128xf32>, vector<16x128xf32> -> vector<16x128xf32>
    %15 = arith.addf %12, %14 : vector<16x128xf32>
    %c0_6 = arith.constant 0 : index
    %c0_7 = arith.constant 0 : index
    %16 = vector.load %arg4[%c0_6, %c0_7] : memref<16x128xf32, #tpu.memory_space<vmem>>, vector<16x128xf32>
    tpu.vector_store %arg4[%c0_6, %c0_7], %15 {strides = array<i32>} : memref<16x128xf32, #tpu.memory_space<vmem>>, vector<16x128xf32>,
    %c0_i32_8 = arith.constant 0 : i32
    %17 = arith.cmpi eq, %arg1, %c0_i32_8 : i32
    %18 = arith.extui %17 : i1 to i32
    %c0_i32_9 = arith.constant 0 : i32
    %19 = arith.cmpi ne, %18, %c0_i32_9 : i32
    scf.if %19 {
      %c0_10 = arith.constant 0 : index
      %c0_11 = arith.constant 0 : index
      %20 = vector.load %arg4[%c0_10, %c0_11] : memref<16x128xf32, #tpu.memory_space<vmem>>, vector<16x128xf32>
      %cst_12 = arith.constant 5.000000e-01 : f32
      %21 = vector.broadcast %cst_12 : f32 to vector<16x128xf32>
      %22 = arith.mulf %20, %21 : vector<16x128xf32>
      %c0_13 = arith.constant 0 : index
      %c0_14 = arith.constant 0 : index
      %23 = vector.load %arg4[%c0_13, %c0_14] : memref<16x128xf32, #tpu.memory_space<vmem>>, vector<16x128xf32>
      tpu.vector_store %arg4[%c0_13, %c0_14], %22 {strides = array<i32>} : memref<16x128xf32, #tpu.memory_space<vmem>>, vector<16x128xf32>,
    } else {
    }
    return
  }
  func.func @transform_0(%arg0: i32, %arg1: i32) -> (i32, i32) {
    %c0_i32 = arith.constant 0 : i32
    %c0_i32_0 = arith.constant 0 : i32
    return %c0_i32, %arg1 : i32, i32
  }
  func.func @transform_1(%arg0: i32, %arg1: i32) -> (i32, i32) {
    %c0_i32 = arith.constant 0 : i32
    %c0_i32_0 = arith.constant 0 : i32
    return %arg1, %c0_i32 : i32, i32
  }
  func.func @transform_2(%arg0: i32, %arg1: i32) -> (i32, i32) {
    %c0_i32 = arith.constant 0 : i32
    %c0_i32_0 = arith.constant 0 : i32
    return %arg0, %c0_i32 : i32, i32
  }
}

</mosaic_0001>

<llo_original>
// kernel: tpu_custom_call.1
$region0: #{tpu_custom_call.1}
  #allocation0 [shape = 'u32[]', space=smem, size = 0x4, offset = 0x4, fixed_abs, tag = 'smem constant byte address 0x4 - core index']
  #allocation1 [shape = 'u32[144,128]{1,0:T(1,128)}', space=vmem, size = 0x12000, scoped, tag = 'internal scratch']
  %s0 = inlined_call_operand.hbm [shape: s32[1,128], index: 0, kind: input, shape index: {}]
  %s1 = inlined_call_operand.hbm [shape: f32[128,128], index: 1, kind: input, shape index: {}]
  %s2 = inlined_call_operand.hbm [shape: f32[16,128], index: 2, kind: output, shape index: {}]
  %s3 = sld [smem:[#allocation0]]
  $region34: #{tpu_custom_call.1} parent=0
    _
  %s5 = ssub.s32 1, %s3
  %s6 = scalar_select 0, %s5, %s3
  $region1: #{tpu_custom_call.1} parent=0
    #allocation2 [shape = 'u8[512]{0}', space=vmem, size = 0x400, scoped, tag = 'input window, operand 0, single buffered']
    #allocation3 [shape = 's32[1]{0}', space=sflag, size = 0x4, scoped, tag = 'scoped memory for tpu_custom_call.1']
    #allocation4 [shape = 's32[1]{0}', space=sflag, size = 0x4, scoped, tag = 'scoped memory for tpu_custom_call.1']
    #allocation5 [shape = 'u8[65536]{0}', space=vmem, size = 0x10000, scoped, tag = 'input window, operand 1, single buffered']
    #allocation6 [shape = 's32[1]{0}', space=sflag, size = 0x4, scoped, tag = 'scoped memory for tpu_custom_call.1']
    #allocation7 [shape = 'u8[8192]{0}', space=vmem, size = 0x2000, scoped, tag = 'output window, operand 0, single buffered']
    %7 = vsyncpa [#allocation3], 0
    %8 = vsyncpa [#allocation6], 0
    %9 = vsyncpa [#allocation4], 0
    // Predicated region
    $region2: #{tpu_custom_call.1} parent=1 // pred_check
      _
    $region3: #{tpu_custom_call.1} parent=1 // pred_check_branch
      %11 = sbr.rel (0) target = $region5
    $region4: #{tpu_custom_call.1} parent=1 // pred_region
      %s13 = ssub.s32 16, 16
      %14 = vsyncadd [#allocation3], %s13
      %s16 = sshll.u32 [#allocation2], 4
      %s17 = int_to_ptr.vmem [resolvable:$true] %s16
      %19 = dma.hbm_to_vmem [thread:$0]  %s0, 16, %s17, [#allocation3]
    $region5: #{tpu_custom_call.1} parent=1 // pred_fallthru
      _
    // Predicated region
    $region6: #{tpu_custom_call.1} parent=1 // pred_check
      _
    $region7: #{tpu_custom_call.1} parent=1 // pred_check_branch
      %21 = sbr.rel (0) target = $region9
    $region8: #{tpu_custom_call.1} parent=1 // pred_region
      %s23 = ssub.s32 2048, 2048
      %24 = vsyncadd [#allocation6], %s23
      %s25 = sshll.u32 [#allocation5], 4
      %s26 = int_to_ptr.vmem [resolvable:$true] %s25
      %31 = dma.hbm_to_vmem [thread:$0]  %s1, 2048, %s26, [#allocation6], 128, 128, 8
    $region9: #{tpu_custom_call.1} parent=1 // pred_fallthru
      _
    // Predicated region
    $region10: #{tpu_custom_call.1} parent=1 // pred_check
      _
    $region11: #{tpu_custom_call.1} parent=1 // pred_check_branch
      %33 = sbr.rel (0) target = $region13
    $region12: #{tpu_custom_call.1} parent=1 // pred_region
      %34 = dma.done [#allocation3], 16
    $region13: #{tpu_custom_call.1} parent=1 // pred_fallthru
      _
    // Predicated region
    $region14: #{tpu_custom_call.1} parent=1 // pred_check
      _
    $region15: #{tpu_custom_call.1} parent=1 // pred_check_branch
      %36 = sbr.rel (0) target = $region17
    $region16: #{tpu_custom_call.1} parent=1 // pred_region
      %37 = dma.done [#allocation6], 2048
    $region17: #{tpu_custom_call.1} parent=1 // pred_fallthru
      _
    %p38 = scmp.eq.s32.totalorder 0, 0
    // Predicated region
    $region18: #{tpu_custom_call.1} parent=1 // pred_check
      %p39 = pneg %p38
    $region19: #{tpu_custom_call.1} parent=1 // pred_check_branch
      %41 = sbr.rel (%p39) target = $region21
    $region20: #{tpu_custom_call.1} parent=1 // pred_region
      %42 = vst [vmem:[#allocation7] sm:$0xff] 0.0
      %43 = vst [vmem:[#allocation7 + $0x8] sm:$0xff] 0.0
    $region21: #{tpu_custom_call.1} parent=1 // pred_fallthru
      _
    %v44 = vld [vmem:[#allocation2] sm:$0x1]
    %v45 = vlaneseq
    %v46 = vshrl.u32 %v45, 7
    %v47 = vadd.s32 %v46, 8
    %s48 = smul.u32 0, 16
    %v49 = vstv %s48
    %v50 = vadd.s32 %v46, %v49
    %v51 = vadd.s32 %v47, %v49
    %v52 = vlaneseq
    %v53 = vshrl.u32 %v52, 7
    %v54 = vsub.s32 0, %v53
    %v55 = vrot.slane %v44, %v54
    %vm56 = vcmp.eq.s32.totalorder %v55, %v50
    %vm57 = vcmp.eq.s32.totalorder %v55, %v51
    %v58 = vsel %vm56, 1, 0
    %v59 = vsel %vm57, 1, 0
    %v60 = vcvt.s32.f32 %v58
    %v61 = vcvt.s32.f32 %v59
    %v62 = vld [vmem:[#allocation7] sm:$0xff]
    %v63 = vld [vmem:[#allocation7 + $0x8] sm:$0xff]
    %v64 = vld [vmem:[#allocation5] sm:$0xff]
    %v65 = vld [vmem:[#allocation5 + $0x8] sm:$0xff]
    %v66 = vld [vmem:[#allocation5 + $0x10] sm:$0xff]
    %v67 = vld [vmem:[#allocation5 + $0x18] sm:$0xff]
    %v68 = vld [vmem:[#allocation5 + $0x20] sm:$0xff]
    %v69 = vld [vmem:[#allocation5 + $0x28] sm:$0xff]
    %v70 = vld [vmem:[#allocation5 + $0x30] sm:$0xff]
    %v71 = vld [vmem:[#allocation5 + $0x38] sm:$0xff]
    %v72 = vld [vmem:[#allocation5 + $0x40] sm:$0xff]
    %v73 = vld [vmem:[#allocation5 + $0x48] sm:$0xff]
    %v74 = vld [vmem:[#allocation5 + $0x50] sm:$0xff]
    %v75 = vld [vmem:[#allocation5 + $0x58] sm:$0xff]
    %v76 = vld [vmem:[#allocation5 + $0x60] sm:$0xff]
    %v77 = vld [vmem:[#allocation5 + $0x68] sm:$0xff]
    %v78 = vld [vmem:[#allocation5 + $0x70] sm:$0xff]
    %v79 = vld [vmem:[#allocation5 + $0x78] sm:$0xff]
    %80 = vmatprep.subr.mxu0 0.0
    %81 = vmatpush1.msra.mxu0 %v64
    %82 = vmatprep.subr.mxu0 0.0
    %83 = vmatpush1.msra.mxu0 %v65
    %84 = vmatprep.subr.mxu0 0.0
    %85 = vmatpush1.msra.mxu0 %v66
    %86 = vmatprep.subr.mxu0 0.0
    %87 = vmatpush1.msra.mxu0 %v67
    %88 = vmatprep.subr.mxu0 0.0
    %89 = vmatpush1.msra.mxu0 %v68
    %90 = vmatprep.subr.mxu0 0.0
    %91 = vmatpush1.msra.mxu0 %v69
    %92 = vmatprep.subr.mxu0 0.0
    %93 = vmatpush1.msra.mxu0 %v70
    %94 = vmatprep.subr.mxu0 0.0
    %95 = vmatpush1.msra.mxu0 %v71
    %96 = vmatprep.subr.mxu0 0.0
    %97 = vmatpush1.msra.mxu0 %v72
    %98 = vmatprep.subr.mxu0 0.0
    %99 = vmatpush1.msra.mxu0 %v73
    %100 = vmatprep.subr.mxu0 0.0
    %101 = vmatpush1.msra.mxu0 %v74
    %102 = vmatprep.subr.mxu0 0.0
    %103 = vmatpush1.msra.mxu0 %v75
    %104 = vmatprep.subr.mxu0 0.0
    %105 = vmatpush1.msra.mxu0 %v76
    %106 = vmatprep.subr.mxu0 0.0
    %107 = vmatpush1.msra.mxu0 %v77
    %108 = vmatprep.subr.mxu0 0.0
    %109 = vmatpush1.msra.mxu0 %v78
    %110 = vmatprep.subr.mxu0 0.0
    %111 = vmatpush1.msra.mxu0 %v79
    %112 = vmatprep.subr.mxu0 0.0
    %113 = vmatpush1.msra.mxu0 0.0
    %114 = vmatprep.subr.mxu0 0.0
    %115 = vmatpush1.msra.mxu0 0.0
    %116 = vmatprep.subr.mxu0 0.0
    %117 = vmatpush1.msra.mxu0 0.0
    %118 = vmatprep.subr.mxu0 0.0
    %119 = vmatpush1.msra.mxu0 0.0
    %120 = vmatprep.subr.mxu0 0.0
    %121 = vmatpush1.msra.mxu0 0.0
    %122 = vmatprep.subr.mxu0 0.0
    %123 = vmatpush1.msra.mxu0 0.0
    %124 = vmatprep.subr.mxu0 0.0
    %125 = vmatpush1.msra.mxu0 0.0
    %126 = vmatprep.subr.mxu0 0.0
    %127 = vmatpush1.msra.mxu0 0.0
    %128 = vmatprep.subr.mxu0 0.0
    %129 = vmatpush1.msra.mxu0 0.0
    %130 = vmatprep.subr.mxu0 0.0
    %131 = vmatpush1.msra.mxu0 0.0
    %132 = vmatprep.subr.mxu0 0.0
    %133 = vmatpush1.msra.mxu0 0.0
    %134 = vmatprep.subr.mxu0 0.0
    %135 = vmatpush1.msra.mxu0 0.0
    %136 = vmatprep.subr.mxu0 0.0
    %137 = vmatpush1.msra.mxu0 0.0
    %138 = vmatprep.subr.mxu0 0.0
    %139 = vmatpush1.msra.mxu0 0.0
    %140 = vmatprep.subr.mxu0 0.0
    %141 = vmatpush1.msra.mxu0 0.0
    %142 = vmatprep.subr.mxu0 0.0
    %143 = vmatpush1.msra.mxu0 0.0
    %144 = vmatprep.mubr.f32.mxu0 0.0
    %145 = vmatmul.mubr.f32.gmra.mrb[0].mxu0 %v60
    %v146 = vpop.f32.mrb[0].mxu0
    %v147 = vadd.f32 0.0, %v146
    %v148 = vpop.f32.mrb[0].mxu0
    %149 = vmatprep.mubr.f32.mxu0 0.0
    %150 = vmatmul.mubr.f32.gmra.mrb[0].mxu0 %v61
    %v151 = vpop.f32.mrb[0].mxu0
    %v152 = vadd.f32 0.0, %v151
    %v153 = vpop.f32.mrb[0].mxu0
    %154 = vdwg.mxu0
    %v155 = vadd.f32 %v62, %v147
    %v156 = vadd.f32 %v63, %v152
    %157 = vst [vmem:[#allocation7] sm:$0xff] %v155
    %158 = vst [vmem:[#allocation7 + $0x8] sm:$0xff] %v156
    // Predicated region
    $region22: #{tpu_custom_call.1} parent=1 // pred_check
      %p159 = pneg %p38
    $region23: #{tpu_custom_call.1} parent=1 // pred_check_branch
      %161 = sbr.rel (%p159) target = $region25
    $region24: #{tpu_custom_call.1} parent=1 // pred_region
      %v162 = vld [vmem:[#allocation7] sm:$0xff]
      %v163 = vld [vmem:[#allocation7 + $0x8] sm:$0xff]
      %v164 = vmul.f32 %v162, 0.5
      %v165 = vmul.f32 %v163, 0.5
      %166 = vst [vmem:[#allocation7] sm:$0xff] %v164
      %167 = vst [vmem:[#allocation7 + $0x8] sm:$0xff] %v165
    $region25: #{tpu_custom_call.1} parent=1 // pred_fallthru
      _
    // Predicated region
    $region26: #{tpu_custom_call.1} parent=1 // pred_check
      _
    $region27: #{tpu_custom_call.1} parent=1 // pred_check_branch
      %169 = sbr.rel (0) target = $region29
    $region28: #{tpu_custom_call.1} parent=1 // pred_region
      %s171 = ssub.s32 256, 256
      %172 = vsyncadd [#allocation4], %s171
      %s173 = sshll.u32 [#allocation7], 4
      %s174 = int_to_ptr.vmem [resolvable:$true] %s173
      %179 = dma.vmem_to_hbm [thread:$0]  %s174, 256, %s2, [#allocation4], 128, 128, 8
    $region29: #{tpu_custom_call.1} parent=1 // pred_fallthru
      _
    // Predicated region
    $region30: #{tpu_custom_call.1} parent=1 // pred_check
      _
    $region31: #{tpu_custom_call.1} parent=1 // pred_check_branch
      %181 = sbr.rel (0) target = $region33
    $region32: #{tpu_custom_call.1} parent=1 // pred_region
      %182 = dma.done [#allocation4], 256
    $region33: #{tpu_custom_call.1} parent=1 // pred_fallthru
      _
    %183 = vsyncpa [#allocation3], 1
    %184 = vsyncpa [#allocation6], 1
    %185 = vsyncpa [#allocation4], 1

</llo_original>
